<compile_context>
chip_gen: v5e
topology: v5e:2x2
jax: 0.10.0
libtpu: 0.0.40
codegen_flags: <defaults>
</compile_context>

<pallas_src>
import jax
import jax.numpy as jnp
from jax.experimental import pallas as pl
from jax.experimental.pallas import tpu as pltpu

_LANE = 128  # lane-padded fused output width (>= 3 BIO cols + C sent cols)


def absa_head_kernel(hid_ref, mask_ref, w_ref, b_ref, bio_ref, sent_ref):
    Bt, S, D = hid_ref.shape
    N = w_ref.shape[-1]  # lane-padded fused width (128)

    # Single fused MXU pass: (Bt*S, D) @ (D, N) with f32 accumulation.
    # hid stays in its storage dtype (bf16 ok); the reshape is a free
    # collapse of the leading dims (layout unchanged).
    x2d = hid_ref[...].reshape(Bt * S, D)
    proj = jnp.dot(x2d, w_ref[...], preferred_element_type=jnp.float32)
    proj = proj + b_ref[...]                      # packed bias: b_bio | b_sent | 0
    proj3 = proj.reshape(Bt, S, N)

    # Token-level BIO logits: lane-dense padded slab (cols 0:3 are real).
    bio_ref[...] = proj3.astype(bio_ref.dtype)

    # Sentence-level logits: masked-mean pool the projected slab in f32.
    # (Pooling commutes with the linear map; adding the constant bias before
    #  the weighted mean is exact.  A fully-masked row yields NaN, matching
    #  the naive PyTorch behavior.)
    mask = mask_ref[...].astype(jnp.float32)       # (Bt, S)
    msum = mask.sum(axis=1, keepdims=True)         # (Bt, 1)
    pooled = (proj3 * mask[:, :, None]).sum(axis=1) / msum   # (Bt, N)
    sent_ref[...] = pooled.astype(sent_ref.dtype)


def _pick_batch_tile(B, S, D, in_itemsize,
                     stream_budget_bytes=12 * 1024 * 1024):
    """Largest batch tile whose double-buffered streaming footprint fits a
    conservative VMEM budget (safe for v5e's 16 MiB default scoped VMEM and
    for v7x's smaller 64 MiB physical VMEM). Bt must be a multiple of 8 or
    equal to B (block-shape constraint on the 2-D mask / sent operands)."""
    per_b = (S * D * in_itemsize      # hid block
             + S * 4                  # mask block (f32)
             + S * _LANE * 4          # padded token-logit slab (f32)
             + _LANE * 4)             # padded sent-logit row (f32)
    max_bt = max(1, stream_budget_bytes // (2 * per_b))  # 2x: double-buffering
    if B <= max_bt:
        return B
    bt = (max_bt // 8) * 8
    while bt >= 8:
        if B % bt == 0:
            return bt
        bt -= 8
    return B  # no clean multiple-of-8 divisor: fall back to a single block


def absa_head_forward(hid, mask, w_bio, b_bio, w_sent, b_sent):
    B, S, D = hid.shape
    C = w_sent.shape[1]
    N = _LANE
    assert 3 + C <= N, "fused lane-padded width too small"

    # Pack the two projections + biases into one lane-padded operand each
    # (single weight DMA per call instead of four tiny ones).
    wdt = hid.dtype
    w_cat = (jnp.zeros((D, N), dtype=wdt)
             .at[:, 0:3].set(w_bio.astype(wdt))
             .at[:, 3:3 + C].set(w_sent.astype(wdt)))
    b_cat = (jnp.zeros((1, N), dtype=jnp.float32)
             .at[:, 0:3].set(b_bio.astype(jnp.float32))
             .at[:, 3:3 + C].set(b_sent.astype(jnp.float32)))

    Bt = _pick_batch_tile(B, S, D, jnp.dtype(hid.dtype).itemsize)
    grid = (B // Bt,)

    bio_pad, sent_pad = pl.pallas_call(
        absa_head_kernel,
        out_shape=(jax.ShapeDtypeStruct((B, S, N), jnp.float32),
                   jax.ShapeDtypeStruct((B, N), jnp.float32)),
        grid=grid,
        in_specs=[
            pl.BlockSpec((Bt, S, D), lambda b: (b, 0, 0)),   # hid (streamed)
            pl.BlockSpec((Bt, S), lambda b: (b, 0)),         # mask (streamed)
            pl.BlockSpec((D, N), lambda b: (0, 0)),          # fused weight
            pl.BlockSpec((1, N), lambda b: (0, 0)),          # fused bias
        ],
        out_specs=(
            pl.BlockSpec((Bt, S, N), lambda b: (b, 0, 0)),   # padded BIO slab
            pl.BlockSpec((Bt, N), lambda b: (b, 0)),         # padded sent row
        ),
        compiler_params=pltpu.CompilerParams(
            dimension_semantics=("parallel",)),
    )(hid, mask.astype(jnp.float32), w_cat, b_cat)

    return {'bio_logits': bio_pad[..., :3],
            'sent_logits': sent_pad[:, 3:3 + C]}


if __name__ == "__main__":
    # Small shapes consistent with the module's forward:
    #   hid: [B, S, D], mask: [B, S], num_cls = C
    B, S, D, C = 2, 8, 32, 4

    key = jax.random.PRNGKey(0)
    k1, k2, k3, k4, k5 = jax.random.split(key, 5)

    hid = jax.random.normal(k1, (B, S, D), dtype=jnp.float32)
    # Attention-style mask with some padding in the second example.
    lengths = jnp.array([S, 5], dtype=jnp.int32)
    mask = (jnp.arange(S)[None, :] < lengths[:, None]).astype(jnp.float32)

    # Deterministic parameter init (synthetic weights, no checkpoint).
    w_bio = jax.random.normal(k2, (D, 3), dtype=jnp.float32) * 0.05
    b_bio = jax.random.normal(k3, (3,), dtype=jnp.float32) * 0.05
    w_sent = jax.random.normal(k4, (D, C), dtype=jnp.float32) * 0.05
    b_sent = jax.random.normal(k5, (C,), dtype=jnp.float32) * 0.05

    out = absa_head_forward(hid, mask, w_bio, b_bio, w_sent, b_sent)
    jax.block_until_ready(out)

    # Pure-JAX reference check of the PyTorch forward semantics.
    pooled_ref = (hid * mask[:, :, None]).sum(1) / mask.sum(1, keepdims=True)
    bio_ref = hid @ w_bio + b_bio
    sent_ref = pooled_ref @ w_sent + b_sent
    assert out['bio_logits'].shape == (B, S, 3)
    assert out['sent_logits'].shape == (B, C)
    assert jnp.allclose(out['bio_logits'], bio_ref, atol=1e-5, rtol=1e-5)
    assert jnp.allclose(out['sent_logits'], sent_ref, atol=1e-5, rtol=1e-5)

    print("KERNEL_OK")
</pallas_src>

<mosaic_0001>
module attributes {stable_mosaic.version = 11 : i64} {
  func.func @absa_head_kernel(%arg0: i32, %arg1: memref<2x8x32xf32, #tpu.memory_space<vmem>>, %arg2: memref<2x8xf32, #tpu.memory_space<vmem>>, %arg3: memref<32x128xf32, #tpu.memory_space<vmem>>, %arg4: memref<1x128xf32, #tpu.memory_space<vmem>>, %arg5: memref<2x8x128xf32, #tpu.memory_space<vmem>>, %arg6: memref<2x128xf32, #tpu.memory_space<vmem>>) attributes {dimension_semantics = [#tpu.dimension_semantics<parallel>], iteration_bounds = array<i64: 1>, scalar_prefetch = 0 : i64, scratch_operands = 0 : i64, tpu.core_type = #tpu.core_type<tc>, window_params = [{transform_indices = @transform_0, window_bounds = array<i64: 2, 8, 32>}, {transform_indices = @transform_1, window_bounds = array<i64: 2, 8>}, {pipeline_mode = #tpu.pipeline_mode<synchronous>, transform_indices = @transform_2, window_bounds = array<i64: 32, 128>}, {pipeline_mode = #tpu.pipeline_mode<synchronous>, transform_indices = @transform_3, window_bounds = array<i64: 1, 128>}, {transform_indices = @transform_4, window_bounds = array<i64: 2, 8, 128>}, {transform_indices = @transform_5, window_bounds = array<i64: 2, 128>}]} {
    %c0 = arith.constant 0 : index
    %c0_0 = arith.constant 0 : index
    %c0_1 = arith.constant 0 : index
    %0 = vector.load %arg1[%c0, %c0_0, %c0_1] : memref<2x8x32xf32, #tpu.memory_space<vmem>>, vector<2x8x32xf32>
    %1 = vector.shape_cast %0 : vector<2x8x32xf32> to vector<16x32xf32>
    %c0_2 = arith.constant 0 : index
    %c0_3 = arith.constant 0 : index
    %2 = vector.load %arg3[%c0_2, %c0_3] : memref<32x128xf32, #tpu.memory_space<vmem>>, vector<32x128xf32>
    %cst = arith.constant dense<0.000000e+00> : vector<16x128xf32>
    %3 = tpu.matmul %1, %2, %cst {dimension_numbers = #tpu.dot_dimension_numbers<[1], [0], [0], [1], [0, 0, 1, 1], [], []>} : vector<16x32xf32>, vector<32x128xf32>, vector<16x128xf32> -> vector<16x128xf32>
    %c0_4 = arith.constant 0 : index
    %c0_5 = arith.constant 0 : index
    %4 = vector.load %arg4[%c0_4, %c0_5] : memref<1x128xf32, #tpu.memory_space<vmem>>, vector<1x128xf32>
    %5 = vector.broadcast %4 : vector<1x128xf32> to vector<16x128xf32>
    %6 = arith.addf %3, %5 : vector<16x128xf32>
    %7 = vector.shape_cast %6 : vector<16x128xf32> to vector<2x8x128xf32>
    %c0_6 = arith.constant 0 : index
    %c0_7 = arith.constant 0 : index
    %c0_8 = arith.constant 0 : index
    %8 = vector.load %arg5[%c0_6, %c0_7, %c0_8] : memref<2x8x128xf32, #tpu.memory_space<vmem>>, vector<2x8x128xf32>
    tpu.vector_store %arg5[%c0_6, %c0_7, %c0_8], %7 {strides = array<i32>} : memref<2x8x128xf32, #tpu.memory_space<vmem>>, vector<2x8x128xf32>,
    %c0_9 = arith.constant 0 : index
    %c0_10 = arith.constant 0 : index
    %9 = vector.load %arg2[%c0_9, %c0_10] : memref<2x8xf32, #tpu.memory_space<vmem>>, vector<2x8xf32>
    %cst_11 = arith.constant dense<0.000000e+00> : vector<2xf32>
    %10 = vector.multi_reduction <add>, %9, %cst_11 [1] : vector<2x8xf32> to vector<2xf32>
    %11 = vector.shape_cast %10 : vector<2xf32> to vector<2x1xf32>
    %12 = vector.shape_cast %9 : vector<2x8xf32> to vector<2x8x1xf32>
    %13 = vector.broadcast %12 : vector<2x8x1xf32> to vector<2x8x128xf32>
    %14 = arith.mulf %7, %13 : vector<2x8x128xf32>
    %cst_12 = arith.constant dense<0.000000e+00> : vector<2x128xf32>
    %15 = vector.multi_reduction <add>, %14, %cst_12 [1] : vector<2x8x128xf32> to vector<2x128xf32>
    %16 = vector.broadcast %11 : vector<2x1xf32> to vector<2x128xf32>
    %17 = arith.divf %15, %16 : vector<2x128xf32>
    %c0_13 = arith.constant 0 : index
    %c0_14 = arith.constant 0 : index
    %18 = vector.load %arg6[%c0_13, %c0_14] : memref<2x128xf32, #tpu.memory_space<vmem>>, vector<2x128xf32>
    tpu.vector_store %arg6[%c0_13, %c0_14], %17 {strides = array<i32>} : memref<2x128xf32, #tpu.memory_space<vmem>>, vector<2x128xf32>,
    return
  }
  func.func @transform_0(%arg0: i32) -> (i32, i32, i32) {
    %c0_i32 = arith.constant 0 : i32
    %c0_i32_0 = arith.constant 0 : i32
    %c0_i32_1 = arith.constant 0 : i32
    return %arg0, %c0_i32, %c0_i32_0 : i32, i32, i32
  }
  func.func @transform_1(%arg0: i32) -> (i32, i32) {
    %c0_i32 = arith.constant 0 : i32
    %c0_i32_0 = arith.constant 0 : i32
    return %arg0, %c0_i32 : i32, i32
  }
  func.func @transform_2(%arg0: i32) -> (i32, i32) {
    %c0_i32 = arith.constant 0 : i32
    %c0_i32_0 = arith.constant 0 : i32
    %c0_i32_1 = arith.constant 0 : i32
    return %c0_i32, %c0_i32_0 : i32, i32
  }
  func.func @transform_3(%arg0: i32) -> (i32, i32) {
    %c0_i32 = arith.constant 0 : i32
    %c0_i32_0 = arith.constant 0 : i32
    %c0_i32_1 = arith.constant 0 : i32
    return %c0_i32, %c0_i32_0 : i32, i32
  }
  func.func @transform_4(%arg0: i32) -> (i32, i32, i32) {
    %c0_i32 = arith.constant 0 : i32
    %c0_i32_0 = arith.constant 0 : i32
    %c0_i32_1 = arith.constant 0 : i32
    return %arg0, %c0_i32, %c0_i32_0 : i32, i32, i32
  }
  func.func @transform_5(%arg0: i32) -> (i32, i32) {
    %c0_i32 = arith.constant 0 : i32
    %c0_i32_0 = arith.constant 0 : i32
    return %arg0, %c0_i32 : i32, i32
  }
}

</mosaic_0001>

<llo_original>
// kernel: tpu_custom_call.1
$region0: #{tpu_custom_call.1}
  #allocation0 [shape = 'u32[]', space=smem, size = 0x4, offset = 0x4, fixed_abs, tag = 'smem constant byte address 0x4 - core index']
  #allocation1 [shape = 'u32[72,128]{1,0:T(1,128)}', space=vmem, size = 0x9000, scoped, tag = 'internal scratch']
  %s0 = inlined_call_operand.hbm [shape: f32[2,8,32], index: 0, kind: input, shape index: {}]
  %s1 = inlined_call_operand.hbm [shape: f32[2,8], index: 1, kind: input, shape index: {}]
  %s2 = inlined_call_operand.hbm [shape: f32[32,128], index: 2, kind: input, shape index: {}]
  %s3 = inlined_call_operand.vmem [shape: f32[1,128], index: 3, kind: input, shape index: {}]
  %s4 = inlined_call_operand.hbm [shape: f32[2,8,128], index: 4, kind: output, shape index: {0}]
  %s5 = inlined_call_operand.hbm [shape: f32[2,128], index: 5, kind: output, shape index: {1}]
  %6 = xla_tuple %s4, %s5
  %s7 = sld [smem:[#allocation0]]
  $region46: #{tpu_custom_call.1} parent=0
    _
  %s9 = ssub.s32 1, %s7
  %s10 = scalar_select 0, %s9, %s7
  $region1: #{tpu_custom_call.1} parent=0
    #allocation2 [shape = 'u8[8192]{0}', space=vmem, size = 0x2000, scoped, tag = 'input window, operand 0, single buffered']
    #allocation3 [shape = 's32[1]{0}', space=sflag, size = 0x4, scoped, tag = 'scoped memory for tpu_custom_call.1']
    #allocation4 [shape = 's32[1]{0}', space=sflag, size = 0x4, scoped, tag = 'scoped memory for tpu_custom_call.1']
    #allocation5 [shape = 'u8[1024]{0}', space=vmem, size = 0x400, scoped, tag = 'input window, operand 1, single buffered']
    #allocation6 [shape = 's32[1]{0}', space=sflag, size = 0x4, scoped, tag = 'scoped memory for tpu_custom_call.1']
    #allocation7 [shape = 'u8[16384]{0}', space=vmem, size = 0x4000, scoped, tag = 'input window, operand 2, single buffered']
    #allocation8 [shape = 'u8[8192]{0}', space=vmem, size = 0x2000, scoped, tag = 'output window, operand 0, single buffered']
    #allocation9 [shape = 'u8[1024]{0}', space=vmem, size = 0x400, scoped, tag = 'output window, operand 1, single buffered']
    #allocation10 [shape = 's32[1]{0}', space=sflag, size = 0x4, scoped, tag = 'scoped memory for tpu_custom_call.1']
    %11 = vsyncpa [#allocation3], 0
    %12 = vsyncpa [#allocation6], 0
    %13 = vsyncpa [#allocation4], 0
    %14 = vsyncpa [#allocation10], 0
    // Predicated region
    $region2: #{tpu_custom_call.1} parent=1 // pred_check
      _
    $region3: #{tpu_custom_call.1} parent=1 // pred_check_branch
      %16 = sbr.rel (0) target = $region5
    $region4: #{tpu_custom_call.1} parent=1 // pred_region
      %18 = vsyncadd [#allocation3], 0
      %s19 = sshll.u32 %s0, 4
      %s20 = int_to_ptr.hbm [resolvable:$true] %s19
      %s21 = sshll.u32 [#allocation2], 4
      %s22 = int_to_ptr.vmem [resolvable:$true] %s21
      %27 = dma.hbm_to_vmem [thread:$0]  %s20, 256, %s22, [#allocation3], 128, 128, 8
    $region5: #{tpu_custom_call.1} parent=1 // pred_fallthru
      _
    // Predicated region
    $region6: #{tpu_custom_call.1} parent=1 // pred_check
      _
    $region7: #{tpu_custom_call.1} parent=1 // pred_check_branch
      %29 = sbr.rel (0) target = $region9
    $region8: #{tpu_custom_call.1} parent=1 // pred_region
      %31 = vsyncadd [#allocation6], 0
      %s33 = sshll.u32 %s1, 4
      %s34 = int_to_ptr.hbm [resolvable:$true] %s33
      %s35 = sshll.u32 [#allocation5], 4
      %s36 = int_to_ptr.vmem [resolvable:$true] %s35
      %38 = dma.hbm_to_vmem [thread:$0]  %s34, 32, %s36, [#allocation6]
    $region9: #{tpu_custom_call.1} parent=1 // pred_fallthru
      _
    // Predicated region
    $region10: #{tpu_custom_call.1} parent=1 // pred_check
      _
    $region11: #{tpu_custom_call.1} parent=1 // pred_check_branch
      %40 = sbr.rel (0) target = $region13
    $region12: #{tpu_custom_call.1} parent=1 // pred_region
      %42 = vsyncadd [#allocation6], 0
      %s43 = sshll.u32 %s2, 4
      %s44 = int_to_ptr.hbm [resolvable:$true] %s43
      %s45 = sshll.u32 [#allocation7], 4
      %s46 = int_to_ptr.vmem [resolvable:$true] %s45
      %51 = dma.hbm_to_vmem [thread:$0]  %s44, 512, %s46, [#allocation6], 128, 128, 8
    $region13: #{tpu_custom_call.1} parent=1 // pred_fallthru
      _
    // Predicated region
    $region14: #{tpu_custom_call.1} parent=1 // pred_check
      _
    $region15: #{tpu_custom_call.1} parent=1 // pred_check_branch
      %53 = sbr.rel (0) target = $region17
    $region16: #{tpu_custom_call.1} parent=1 // pred_region
      _
    $region17: #{tpu_custom_call.1} parent=1 // pred_fallthru
      _
    // Predicated region
    $region18: #{tpu_custom_call.1} parent=1 // pred_check
      _
    $region19: #{tpu_custom_call.1} parent=1 // pred_check_branch
      %55 = sbr.rel (0) target = $region21
    $region20: #{tpu_custom_call.1} parent=1 // pred_region
      %57 = dma.done [#allocation3], 256
    $region21: #{tpu_custom_call.1} parent=1 // pred_fallthru
      _
    // Predicated region
    $region22: #{tpu_custom_call.1} parent=1 // pred_check
      _
    $region23: #{tpu_custom_call.1} parent=1 // pred_check_branch
      %59 = sbr.rel (0) target = $region25
    $region24: #{tpu_custom_call.1} parent=1 // pred_region
      %61 = dma.done [#allocation6], 32
    $region25: #{tpu_custom_call.1} parent=1 // pred_fallthru
      _
    // Predicated region
    $region26: #{tpu_custom_call.1} parent=1 // pred_check
      _
    $region27: #{tpu_custom_call.1} parent=1 // pred_check_branch
      %63 = sbr.rel (0) target = $region29
    $region28: #{tpu_custom_call.1} parent=1 // pred_region
      %65 = dma.done [#allocation6], 512
    $region29: #{tpu_custom_call.1} parent=1 // pred_fallthru
      _
    %v66 = vld [vmem:[#allocation2] sm:$0xff]
    %v67 = vld [vmem:[#allocation2 + $0x8] sm:$0xff]
    %v68 = vld [vmem:[#allocation7] sm:$0xff]
    %v69 = vld [vmem:[#allocation7 + $0x8] sm:$0xff]
    %v70 = vld [vmem:[#allocation7 + $0x10] sm:$0xff]
    %v71 = vld [vmem:[#allocation7 + $0x18] sm:$0xff]
    %v72 = vld [vmem:[%s3] sm:$0x1]
    %v74 = vperm.slane %v72, 0
    %vm76 = vcmask 261120
    %v78 = vsel %vm76, %v66, 0
    %v81 = vsel %vm76, %v67, 0
    %83 = vmatpush.msra.mxu0 0.0
    %84 = vmatpush.msra.mxu0 0.0
    %85 = vmatpush.msra.mxu0 0.0
    %86 = vmatpush.msra.mxu0 0.0
    %87 = vmatpush.msra.mxu0 0.0
    %88 = vmatpush.msra.mxu0 0.0
    %89 = vmatpush.msra.mxu0 0.0
    %90 = vmatpush.msra.mxu0 0.0
    %91 = vmatpush.msra.mxu0 0.0
    %92 = vmatpush.msra.mxu0 0.0
    %93 = vmatpush.msra.mxu0 0.0
    %94 = vmatpush.msra.mxu0 0.0
    %95 = vmatpush.msra.mxu0 %v71
    %96 = vmatpush.msra.mxu0 %v70
    %97 = vmatpush.msra.mxu0 %v69
    %98 = vmatpush.msra.mxu0 %v68
    %99 = vmatmul.f32.gmra.mxu0 %v78
    %v100 = vpop.f32.mrf.mxu0
    %v101 = vadd.f32 %v74, %v100
    %102 = vmatmul.f32.gmra.mxu0 %v81
    %v103 = vpop.f32.mrf.mxu0
    %v104 = vadd.f32 %v74, %v103
    %105 = vdwg.mxu0
    %106 = vst [vmem:[#allocation8] sm:$0xff] %v101
    %107 = vst [vmem:[#allocation8 + $0x8] sm:$0xff] %v104
    %v108 = vld [vmem:[#allocation5] sm:$0x3]
    %vm109 = vcmask 58368
    %v110 = vsel %vm109, %v108, 0.0
    %111 = vadd.xlane.f32.xlu0 %v110
    %v112 = vpop.xlane.xlu0 %111
    %v113 = vperm.slane %v108, 0
    %v114 = vlaneseq
    %v115 = vshrl.u32 %v114, 7
    %117 = vset.pattern.permute.xlu0 %v115
    %118 = vperm.xlu0 %117, %v113
    %v119 = vpop.permute.xlu0 %118
    %v120 = vperm.slane %v108, 1
    %v121 = vlaneseq
    %v122 = vshrl.u32 %v121, 7
    %124 = vset.pattern.permute.xlu0 %v122
    %125 = vperm.xlu0 %124, %v120
    %v126 = vpop.permute.xlu0 %125
    %v127 = vmul.f32 %v101, %v119
    %v128 = vmul.f32 %v104, %v126
    %v129 = vrot.slane %v127, 4
    %v130 = vadd.f32 %v127, %v129
    %v131 = vrot.slane %v130, 2
    %v132 = vadd.f32 %v130, %v131
    %v133 = vrot.slane %v132, 1
    %v134 = vadd.f32 %v132, %v133
    %v135 = vrot.slane %v128, 4
    %v136 = vadd.f32 %v128, %v135
    %v137 = vrot.slane %v136, 2
    %v138 = vadd.f32 %v136, %v137
    %v139 = vrot.slane %v138, 1
    %v140 = vadd.f32 %v138, %v139
    %v142 = vrot.slane %v112, 1
    %v145 = vrcp.pop %v112
    %v146 = vmul.f32 %v112, %v145
    %v147 = vsub.f32 1.0, %v146
    %v148 = vmul.f32 %v145, %v147
    %v149 = vadd.f32 %v145, %v148
    %vm150 = vweird.f32 %v112
    %vm151 = vweird.f32 %v145
    %vm152 = vmor %vm150, %vm151
    %v153 = vsel %vm152, %v145, %v149
    %v154 = vand.u32 2147483647, %v112
    %vm155 = vcmp.eq.f32.partialorder %v154, 8.507059e+37
    %v156 = vand.u32 %v112, 2147483648
    %v157 = vor.u32 1.1754944e-38, %v156
    %v158 = vsel %vm155, %v157, %v153
    %v159 = vmul.f32 %v134, %v158
    %v160 = vrcp.pop %v142
    %v161 = vmul.f32 %v142, %v160
    %v162 = vsub.f32 1.0, %v161
    %v163 = vmul.f32 %v160, %v162
    %v164 = vadd.f32 %v160, %v163
    %vm165 = vweird.f32 %v142
    %vm166 = vweird.f32 %v160
    %vm167 = vmor %vm165, %vm166
    %v168 = vsel %vm167, %v160, %v164
    %v169 = vand.u32 2147483647, %v142
    %vm170 = vcmp.eq.f32.partialorder %v169, 8.507059e+37
    %v171 = vand.u32 %v142, 2147483648
    %v172 = vor.u32 1.1754944e-38, %v171
    %v173 = vsel %vm170, %v172, %v168
    %v174 = vmul.f32 %v140, %v173
    %v177 = vrot.slane %v174, 7
    %vm178 = vcmask 1041409
    %v179 = vsel %vm178, %v177, %v159
    %181 = vst [vmem:[#allocation9] sm:$0x3] %v179
    // Predicated region
    $region30: #{tpu_custom_call.1} parent=1 // pred_check
      _
    $region31: #{tpu_custom_call.1} parent=1 // pred_check_branch
      %183 = sbr.rel (0) target = $region33
    $region32: #{tpu_custom_call.1} parent=1 // pred_region
      %185 = vsyncadd [#allocation4], 0
      %s186 = sshll.u32 [#allocation8], 4
      %s187 = int_to_ptr.vmem [resolvable:$true] %s186
      %s188 = sshll.u32 %s4, 4
      %s189 = int_to_ptr.hbm [resolvable:$true] %s188
      %194 = dma.vmem_to_hbm [thread:$0]  %s187, 256, %s189, [#allocation4], 128, 128, 8
    $region33: #{tpu_custom_call.1} parent=1 // pred_fallthru
      _
    // Predicated region
    $region34: #{tpu_custom_call.1} parent=1 // pred_check
      _
    $region35: #{tpu_custom_call.1} parent=1 // pred_check_branch
      %196 = sbr.rel (0) target = $region37
    $region36: #{tpu_custom_call.1} parent=1 // pred_region
      %198 = vsyncadd [#allocation10], 0
      %s200 = sshll.u32 [#allocation9], 4
      %s201 = int_to_ptr.vmem [resolvable:$true] %s200
      %s202 = sshll.u32 %s5, 4
      %s203 = int_to_ptr.hbm [resolvable:$true] %s202
      %205 = dma.vmem_to_hbm [thread:$0]  %s201, 32, %s203, [#allocation10]
    $region37: #{tpu_custom_call.1} parent=1 // pred_fallthru
      _
    // Predicated region
    $region38: #{tpu_custom_call.1} parent=1 // pred_check
      _
    $region39: #{tpu_custom_call.1} parent=1 // pred_check_branch
      %207 = sbr.rel (0) target = $region41
    $region40: #{tpu_custom_call.1} parent=1 // pred_region
      %209 = dma.done [#allocation4], 256
    $region41: #{tpu_custom_call.1} parent=1 // pred_fallthru
      _
    // Predicated region
    $region42: #{tpu_custom_call.1} parent=1 // pred_check
      _
    $region43: #{tpu_custom_call.1} parent=1 // pred_check_branch
      %211 = sbr.rel (0) target = $region45
    $region44: #{tpu_custom_call.1} parent=1 // pred_region
      %213 = dma.done [#allocation10], 32
    $region45: #{tpu_custom_call.1} parent=1 // pred_fallthru
      _
    %214 = vsyncpa [#allocation3], 1
    %215 = vsyncpa [#allocation6], 1
    %216 = vsyncpa [#allocation4], 1
    %217 = vsyncpa [#allocation10], 1

</llo_original>
